<compile_context>
chip_gen: v7x
topology: tpu7x:2x2x1
jax: 0.10.0
libtpu: 0.0.40
codegen_flags: <defaults>
</compile_context>

<pallas_src>
import functools

import numpy as np
import jax
import jax.numpy as jnp
from jax import lax
from jax.experimental import pallas as pl
from jax.experimental.pallas import tpu as pltpu

EPS = 1e-5  # nn.InstanceNorm2d default eps (affine=False, no running stats)


def resblock_kernel(x_ref, m_ref, w1_ref, b1_ref, w2_ref, b2_ref, o_ref, *,
                    W, HW, apply_valid):
    # x_ref : (1, Cp, HWp)   channels on sublanes, flattened spatial on lanes
    # m_ref : (9, HWp) f32   rows 0..7: per-tap zero-pad masks, row 8: valid-lane mask
    # w*_ref: (Cp, 9*Cp) bf16  weights as (C_out, (ky, kx, C_in))
    # b*_ref: (Cp, 1) f32
    # o_ref : (1, Cp, HWp)
    HWp = x_ref.shape[2]
    inv_hw = 1.0 / HW

    x = x_ref[0].astype(jnp.float32)                                  # (Cp, HWp)

    # Tap lane-shifts in (dy, dx) raster order; index 4 is the centre tap.
    shifts = tuple(dy * W + dx for dy in (-1, 0, 1) for dx in (-1, 0, 1))

    def conv3x3(inp, w_ref, b_ref):
        taps, mi = [], 0
        for t, d in enumerate(shifts):
            if t == 4:                                   # centre tap: no shift/mask
                taps.append(inp)
            else:
                v = pltpu.roll(inp, (-d) % HWp, axis=1)  # v[:, k] <- inp[:, k + d]
                taps.append(v * m_ref[mi:mi + 1, :])     # zero-padding mask
                mi += 1
        ops = jnp.concatenate(taps, axis=0).astype(jnp.bfloat16)      # (9*Cp, HWp)
        acc = jnp.dot(w_ref[...], ops, preferred_element_type=jnp.float32)
        return acc + b_ref[...]                                       # f32 (Cp, HWp)

    def inorm_relu(v):
        if apply_valid:                # zero the padded lanes so stats stay exact
            v = v * m_ref[8:9, :]
        s1 = jnp.sum(v, axis=1, keepdims=True)
        s2 = jnp.sum(v * v, axis=1, keepdims=True)
        mean = s1 * inv_hw
        var = jnp.maximum(s2 * inv_hw - mean * mean, 0.0)   # clamp vs cancellation
        inv_std = lax.rsqrt(var + EPS)
        return jnp.maximum(v * inv_std - mean * inv_std, 0.0)

    h = inorm_relu(conv3x3(x, w1_ref, b1_ref))              # conv1 -> IN -> ReLU
    y = inorm_relu(conv3x3(h, w2_ref, b2_ref) + x)          # conv2 + x -> IN -> ReLU
    o_ref[0] = y.astype(o_ref.dtype)


@jax.jit
def resblock_forward(x_nchw, w1, b1, w2, b2):
    """x_nchw: (N, C, H, W) f32.  Weights HWIO (3,3,C,C), biases (C,)."""
    N, C, H, W = x_nchw.shape
    HW = H * W
    HWp = max(128, -(-HW // 128) * 128)   # lane-dense spatial axis
    Cp = max(8, -(-C // 8) * 8)           # sublane-aligned channel axis

    # ---- input: NCHW flattened (free), zero-padded to (Cp, HWp) ----
    x = x_nchw.reshape(N, C, HW)
    x = jnp.pad(x, ((0, 0), (0, Cp - C), (0, HWp - HW)))

    # ---- weights: HWIO -> (C_out, ky*kx*C_in), channel-padded, bf16 ----
    def prep_w(w):
        w = jnp.transpose(w, (3, 0, 1, 2))                        # (Cout, ky, kx, Cin)
        w = jnp.pad(w, ((0, Cp - C), (0, 0), (0, 0), (0, Cp - C)))
        return w.reshape(Cp, 9 * Cp).astype(jnp.bfloat16)

    def prep_b(b):
        return jnp.pad(b, (0, Cp - C)).reshape(Cp, 1).astype(jnp.float32)

    w1k, w2k = prep_w(w1), prep_w(w2)
    b1k, b2k = prep_b(b1), prep_b(b2)

    # ---- zero-padding boundary masks, precomputed as {0,1} float constants ----
    rows = np.arange(HW) // W
    cols = np.arange(HW) % W
    mask_rows = []
    for dy in (-1, 0, 1):
        for dx in (-1, 0, 1):
            if dy == 0 and dx == 0:
                continue
            ok = ((rows + dy >= 0) & (rows + dy < H) &
                  (cols + dx >= 0) & (cols + dx < W))
            m = np.zeros(HWp, np.float32)
            m[:HW] = ok
            mask_rows.append(m)
    valid = np.zeros(HWp, np.float32)
    valid[:HW] = 1.0
    masks = jnp.asarray(np.stack(mask_rows + [valid], axis=0))    # (9, HWp)

    # ---- explicit VMEM budget (tap stack + temps + double-buffered I/O) ----
    est = 40 * Cp * HWp * 4 + 9 * HWp * 4 + 4 * Cp * 9 * Cp * 2
    vmem_limit = int(min(64 * 2 ** 20, max(32 * 2 ** 20, est)))

    kernel = functools.partial(resblock_kernel, W=W, HW=HW,
                               apply_valid=(HWp != HW))
    out = pl.pallas_call(
        kernel,
        out_shape=jax.ShapeDtypeStruct((N, Cp, HWp), x_nchw.dtype),
        grid_spec=pltpu.PrefetchScalarGridSpec(
            num_scalar_prefetch=0,
            grid=(N,),
            in_specs=[
                pl.BlockSpec((1, Cp, HWp), lambda n: (n, 0, 0)),
                pl.BlockSpec((9, HWp), lambda n: (0, 0)),
                pl.BlockSpec((Cp, 9 * Cp), lambda n: (0, 0)),
                pl.BlockSpec((Cp, 1), lambda n: (0, 0)),
                pl.BlockSpec((Cp, 9 * Cp), lambda n: (0, 0)),
                pl.BlockSpec((Cp, 1), lambda n: (0, 0)),
            ],
            out_specs=pl.BlockSpec((1, Cp, HWp), lambda n: (n, 0, 0)),
        ),
        compiler_params=pltpu.CompilerParams(
            dimension_semantics=("parallel",),
            vmem_limit_bytes=vmem_limit),
    )(x, masks, w1k, b1k, w2k, b2k)

    return out[:, :C, :HW].reshape(N, C, H, W)


# -------------------- pure-JAX reference (sanity check) --------------------
def _ref_instance_norm(x_nchw):
    mean = jnp.mean(x_nchw, axis=(2, 3), keepdims=True)
    var = jnp.mean((x_nchw - mean) ** 2, axis=(2, 3), keepdims=True)
    return (x_nchw - mean) * lax.rsqrt(var + EPS)


def _ref_conv(x_nchw, w_hwio, b):
    y = lax.conv_general_dilated(
        x_nchw, w_hwio, window_strides=(1, 1), padding=((1, 1), (1, 1)),
        dimension_numbers=("NCHW", "HWIO", "NCHW"))
    return y + b.reshape(1, -1, 1, 1)


def resblock_reference(x, w1, b1, w2, b2):
    h = jax.nn.relu(_ref_instance_norm(_ref_conv(x, w1, b1)))
    h = _ref_conv(h, w2, b2)
    return jax.nn.relu(_ref_instance_norm(h + x))


if __name__ == "__main__":
    N, C, H, W = 2, 4, 16, 16
    key = jax.random.PRNGKey(0)
    kx, k1, k2, k3, k4 = jax.random.split(key, 5)

    x = jax.random.normal(kx, (N, C, H, W), dtype=jnp.float32)
    # Deterministic parameter init (shapes match nn.Conv2d(f, f, 3, 1, 1), HWIO)
    fan_in = C * 3 * 3
    scale = 1.0 / np.sqrt(fan_in)
    w1 = jax.random.uniform(k1, (3, 3, C, C), jnp.float32, -scale, scale)
    b1 = jax.random.uniform(k2, (C,), jnp.float32, -scale, scale)
    w2 = jax.random.uniform(k3, (3, 3, C, C), jnp.float32, -scale, scale)
    b2 = jax.random.uniform(k4, (C,), jnp.float32, -scale, scale)

    y = resblock_forward(x, w1, b1, w2, b2)
    y = jax.block_until_ready(y)

    y_ref = resblock_reference(x, w1, b1, w2, b2)
    assert y.shape == (N, C, H, W)
    # bf16 MXU operands (f32 accumulation / statistics) -> loosen tolerance vs f32 ref
    assert bool(jnp.allclose(y, y_ref, atol=2e-2, rtol=2e-2))

    print("KERNEL_OK")
</pallas_src>

<mosaic_0001>
module attributes {stable_mosaic.version = 11 : i64} {
  func.func @resblock_kernel(%arg0: i32, %arg1: memref<1x8x256xf32, #tpu.memory_space<vmem>>, %arg2: memref<9x256xf32, #tpu.memory_space<vmem>>, %arg3: memref<8x72xbf16, #tpu.memory_space<vmem>>, %arg4: memref<8x1xf32, #tpu.memory_space<vmem>>, %arg5: memref<8x72xbf16, #tpu.memory_space<vmem>>, %arg6: memref<8x1xf32, #tpu.memory_space<vmem>>, %arg7: memref<1x8x256xf32, #tpu.memory_space<vmem>>) attributes {dimension_semantics = [#tpu.dimension_semantics<parallel>], iteration_bounds = array<i64: 2>, scalar_prefetch = 0 : i64, scratch_operands = 0 : i64, tpu.core_type = #tpu.core_type<tc>, window_params = [{transform_indices = @transform_0, window_bounds = array<i64: 1, 8, 256>}, {pipeline_mode = #tpu.pipeline_mode<synchronous>, transform_indices = @transform_1, window_bounds = array<i64: 9, 256>}, {pipeline_mode = #tpu.pipeline_mode<synchronous>, transform_indices = @transform_2, window_bounds = array<i64: 8, 72>}, {pipeline_mode = #tpu.pipeline_mode<synchronous>, transform_indices = @transform_3, window_bounds = array<i64: 8, 1>}, {pipeline_mode = #tpu.pipeline_mode<synchronous>, transform_indices = @transform_4, window_bounds = array<i64: 8, 72>}, {pipeline_mode = #tpu.pipeline_mode<synchronous>, transform_indices = @transform_5, window_bounds = array<i64: 8, 1>}, {transform_indices = @transform_6, window_bounds = array<i64: 1, 8, 256>}]} {
    %c0 = arith.constant 0 : index
    %c0_0 = arith.constant 0 : index
    %c0_1 = arith.constant 0 : index
    %0 = vector.load %arg1[%c0, %c0_0, %c0_1] : memref<1x8x256xf32, #tpu.memory_space<vmem>>, vector<1x8x256xf32>
    %1 = vector.shape_cast %0 : vector<1x8x256xf32> to vector<8x256xf32>
    %c17_i32 = arith.constant 17 : i32
    %2 = tpu.dynamic_rotate %1 by %c17_i32 dim 1 : vector<8x256xf32>, i32 -> vector<8x256xf32>
    %c0_2 = arith.constant 0 : index
    %c0_3 = arith.constant 0 : index
    %3 = vector.load %arg2[%c0_2, %c0_3] : memref<9x256xf32, #tpu.memory_space<vmem>>, vector<1x256xf32>
    %4 = vector.broadcast %3 : vector<1x256xf32> to vector<8x256xf32>
    %5 = arith.mulf %2, %4 : vector<8x256xf32>
    %c16_i32 = arith.constant 16 : i32
    %6 = tpu.dynamic_rotate %1 by %c16_i32 dim 1 : vector<8x256xf32>, i32 -> vector<8x256xf32>
    %c1 = arith.constant 1 : index
    %c0_4 = arith.constant 0 : index
    %7 = vector.load %arg2[%c1, %c0_4] : memref<9x256xf32, #tpu.memory_space<vmem>>, vector<1x256xf32>
    %8 = vector.broadcast %7 : vector<1x256xf32> to vector<8x256xf32>
    %9 = arith.mulf %6, %8 : vector<8x256xf32>
    %c15_i32 = arith.constant 15 : i32
    %10 = tpu.dynamic_rotate %1 by %c15_i32 dim 1 : vector<8x256xf32>, i32 -> vector<8x256xf32>
    %c2 = arith.constant 2 : index
    %c0_5 = arith.constant 0 : index
    %11 = vector.load %arg2[%c2, %c0_5] : memref<9x256xf32, #tpu.memory_space<vmem>>, vector<1x256xf32>
    %12 = vector.broadcast %11 : vector<1x256xf32> to vector<8x256xf32>
    %13 = arith.mulf %10, %12 : vector<8x256xf32>
    %c1_i32 = arith.constant 1 : i32
    %14 = tpu.dynamic_rotate %1 by %c1_i32 dim 1 : vector<8x256xf32>, i32 -> vector<8x256xf32>
    %c3 = arith.constant 3 : index
    %c0_6 = arith.constant 0 : index
    %15 = vector.load %arg2[%c3, %c0_6] : memref<9x256xf32, #tpu.memory_space<vmem>>, vector<1x256xf32>
    %16 = vector.broadcast %15 : vector<1x256xf32> to vector<8x256xf32>
    %17 = arith.mulf %14, %16 : vector<8x256xf32>
    %c255_i32 = arith.constant 255 : i32
    %18 = tpu.dynamic_rotate %1 by %c255_i32 dim 1 : vector<8x256xf32>, i32 -> vector<8x256xf32>
    %c4 = arith.constant 4 : index
    %c0_7 = arith.constant 0 : index
    %19 = vector.load %arg2[%c4, %c0_7] : memref<9x256xf32, #tpu.memory_space<vmem>>, vector<1x256xf32>
    %20 = vector.broadcast %19 : vector<1x256xf32> to vector<8x256xf32>
    %21 = arith.mulf %18, %20 : vector<8x256xf32>
    %c241_i32 = arith.constant 241 : i32
    %22 = tpu.dynamic_rotate %1 by %c241_i32 dim 1 : vector<8x256xf32>, i32 -> vector<8x256xf32>
    %c5 = arith.constant 5 : index
    %c0_8 = arith.constant 0 : index
    %23 = vector.load %arg2[%c5, %c0_8] : memref<9x256xf32, #tpu.memory_space<vmem>>, vector<1x256xf32>
    %24 = vector.broadcast %23 : vector<1x256xf32> to vector<8x256xf32>
    %25 = arith.mulf %22, %24 : vector<8x256xf32>
    %c240_i32 = arith.constant 240 : i32
    %26 = tpu.dynamic_rotate %1 by %c240_i32 dim 1 : vector<8x256xf32>, i32 -> vector<8x256xf32>
    %c6 = arith.constant 6 : index
    %c0_9 = arith.constant 0 : index
    %27 = vector.load %arg2[%c6, %c0_9] : memref<9x256xf32, #tpu.memory_space<vmem>>, vector<1x256xf32>
    %28 = vector.broadcast %27 : vector<1x256xf32> to vector<8x256xf32>
    %29 = arith.mulf %26, %28 : vector<8x256xf32>
    %c239_i32 = arith.constant 239 : i32
    %30 = tpu.dynamic_rotate %1 by %c239_i32 dim 1 : vector<8x256xf32>, i32 -> vector<8x256xf32>
    %c7 = arith.constant 7 : index
    %c0_10 = arith.constant 0 : index
    %31 = vector.load %arg2[%c7, %c0_10] : memref<9x256xf32, #tpu.memory_space<vmem>>, vector<1x256xf32>
    %32 = vector.broadcast %31 : vector<1x256xf32> to vector<8x256xf32>
    %33 = arith.mulf %30, %32 : vector<8x256xf32>
    %34 = tpu.concatenate %5, %9, %13, %17, %1, %21, %25, %29, %33 in 0 : vector<8x256xf32>, vector<8x256xf32>, vector<8x256xf32>, vector<8x256xf32>, vector<8x256xf32>, vector<8x256xf32>, vector<8x256xf32>, vector<8x256xf32>, vector<8x256xf32> -> vector<72x256xf32>
    %35 = arith.truncf %34 : vector<72x256xf32> to vector<72x256xbf16>
    %c0_11 = arith.constant 0 : index
    %c0_12 = arith.constant 0 : index
    %36 = vector.load %arg3[%c0_11, %c0_12] : memref<8x72xbf16, #tpu.memory_space<vmem>>, vector<8x72xbf16>
    %cst = arith.constant dense<0.000000e+00> : vector<8x256xf32>
    %37 = tpu.matmul %36, %35, %cst {dimension_numbers = #tpu.dot_dimension_numbers<[1], [0], [0], [1], [0, 0, 1, 1], [], []>} : vector<8x72xbf16>, vector<72x256xbf16>, vector<8x256xf32> -> vector<8x256xf32>
    %c0_13 = arith.constant 0 : index
    %c0_14 = arith.constant 0 : index
    %38 = vector.load %arg4[%c0_13, %c0_14] : memref<8x1xf32, #tpu.memory_space<vmem>>, vector<8x1xf32>
    %39 = vector.broadcast %38 : vector<8x1xf32> to vector<8x256xf32>
    %40 = arith.addf %37, %39 : vector<8x256xf32>
    %cst_15 = arith.constant dense<0.000000e+00> : vector<8xf32>
    %41 = vector.multi_reduction <add>, %40, %cst_15 [1] : vector<8x256xf32> to vector<8xf32>
    %42 = vector.shape_cast %41 : vector<8xf32> to vector<8x1xf32>
    %43 = arith.mulf %40, %40 : vector<8x256xf32>
    %cst_16 = arith.constant dense<0.000000e+00> : vector<8xf32>
    %44 = vector.multi_reduction <add>, %43, %cst_16 [1] : vector<8x256xf32> to vector<8xf32>
    %45 = vector.shape_cast %44 : vector<8xf32> to vector<8x1xf32>
    %cst_17 = arith.constant 3.906250e-03 : f32
    %46 = vector.broadcast %cst_17 : f32 to vector<8x1xf32>
    %47 = arith.mulf %42, %46 : vector<8x1xf32>
    %cst_18 = arith.constant 3.906250e-03 : f32
    %48 = vector.broadcast %cst_18 : f32 to vector<8x1xf32>
    %49 = arith.mulf %45, %48 : vector<8x1xf32>
    %50 = arith.mulf %47, %47 : vector<8x1xf32>
    %51 = arith.subf %49, %50 : vector<8x1xf32>
    %cst_19 = arith.constant 0.000000e+00 : f32
    %52 = vector.broadcast %cst_19 : f32 to vector<8x1xf32>
    %53 = arith.maximumf %51, %52 : vector<8x1xf32>
    %cst_20 = arith.constant 9.99999974E-6 : f32
    %54 = vector.broadcast %cst_20 : f32 to vector<8x1xf32>
    %55 = arith.addf %53, %54 : vector<8x1xf32>
    %56 = math.rsqrt %55 : vector<8x1xf32>
    %57 = vector.broadcast %56 : vector<8x1xf32> to vector<8x256xf32>
    %58 = arith.mulf %40, %57 : vector<8x256xf32>
    %59 = arith.mulf %47, %56 : vector<8x1xf32>
    %60 = vector.broadcast %59 : vector<8x1xf32> to vector<8x256xf32>
    %61 = arith.subf %58, %60 : vector<8x256xf32>
    %cst_21 = arith.constant 0.000000e+00 : f32
    %62 = vector.broadcast %cst_21 : f32 to vector<8x256xf32>
    %63 = arith.maximumf %61, %62 : vector<8x256xf32>
    %c17_i32_22 = arith.constant 17 : i32
    %64 = tpu.dynamic_rotate %63 by %c17_i32_22 dim 1 : vector<8x256xf32>, i32 -> vector<8x256xf32>
    %c0_23 = arith.constant 0 : index
    %c0_24 = arith.constant 0 : index
    %65 = vector.load %arg2[%c0_23, %c0_24] : memref<9x256xf32, #tpu.memory_space<vmem>>, vector<1x256xf32>
    %66 = vector.broadcast %65 : vector<1x256xf32> to vector<8x256xf32>
    %67 = arith.mulf %64, %66 : vector<8x256xf32>
    %c16_i32_25 = arith.constant 16 : i32
    %68 = tpu.dynamic_rotate %63 by %c16_i32_25 dim 1 : vector<8x256xf32>, i32 -> vector<8x256xf32>
    %c1_26 = arith.constant 1 : index
    %c0_27 = arith.constant 0 : index
    %69 = vector.load %arg2[%c1_26, %c0_27] : memref<9x256xf32, #tpu.memory_space<vmem>>, vector<1x256xf32>
    %70 = vector.broadcast %69 : vector<1x256xf32> to vector<8x256xf32>
    %71 = arith.mulf %68, %70 : vector<8x256xf32>
    %c15_i32_28 = arith.constant 15 : i32
    %72 = tpu.dynamic_rotate %63 by %c15_i32_28 dim 1 : vector<8x256xf32>, i32 -> vector<8x256xf32>
    %c2_29 = arith.constant 2 : index
    %c0_30 = arith.constant 0 : index
    %73 = vector.load %arg2[%c2_29, %c0_30] : memref<9x256xf32, #tpu.memory_space<vmem>>, vector<1x256xf32>
    %74 = vector.broadcast %73 : vector<1x256xf32> to vector<8x256xf32>
    %75 = arith.mulf %72, %74 : vector<8x256xf32>
    %c1_i32_31 = arith.constant 1 : i32
    %76 = tpu.dynamic_rotate %63 by %c1_i32_31 dim 1 : vector<8x256xf32>, i32 -> vector<8x256xf32>
    %c3_32 = arith.constant 3 : index
    %c0_33 = arith.constant 0 : index
    %77 = vector.load %arg2[%c3_32, %c0_33] : memref<9x256xf32, #tpu.memory_space<vmem>>, vector<1x256xf32>
    %78 = vector.broadcast %77 : vector<1x256xf32> to vector<8x256xf32>
    %79 = arith.mulf %76, %78 : vector<8x256xf32>
    %c255_i32_34 = arith.constant 255 : i32
    %80 = tpu.dynamic_rotate %63 by %c255_i32_34 dim 1 : vector<8x256xf32>, i32 -> vector<8x256xf32>
    %c4_35 = arith.constant 4 : index
    %c0_36 = arith.constant 0 : index
    %81 = vector.load %arg2[%c4_35, %c0_36] : memref<9x256xf32, #tpu.memory_space<vmem>>, vector<1x256xf32>
    %82 = vector.broadcast %81 : vector<1x256xf32> to vector<8x256xf32>
    %83 = arith.mulf %80, %82 : vector<8x256xf32>
    %c241_i32_37 = arith.constant 241 : i32
    %84 = tpu.dynamic_rotate %63 by %c241_i32_37 dim 1 : vector<8x256xf32>, i32 -> vector<8x256xf32>
    %c5_38 = arith.constant 5 : index
    %c0_39 = arith.constant 0 : index
    %85 = vector.load %arg2[%c5_38, %c0_39] : memref<9x256xf32, #tpu.memory_space<vmem>>, vector<1x256xf32>
    %86 = vector.broadcast %85 : vector<1x256xf32> to vector<8x256xf32>
    %87 = arith.mulf %84, %86 : vector<8x256xf32>
    %c240_i32_40 = arith.constant 240 : i32
    %88 = tpu.dynamic_rotate %63 by %c240_i32_40 dim 1 : vector<8x256xf32>, i32 -> vector<8x256xf32>
    %c6_41 = arith.constant 6 : index
    %c0_42 = arith.constant 0 : index
    %89 = vector.load %arg2[%c6_41, %c0_42] : memref<9x256xf32, #tpu.memory_space<vmem>>, vector<1x256xf32>
    %90 = vector.broadcast %89 : vector<1x256xf32> to vector<8x256xf32>
    %91 = arith.mulf %88, %90 : vector<8x256xf32>
    %c239_i32_43 = arith.constant 239 : i32
    %92 = tpu.dynamic_rotate %63 by %c239_i32_43 dim 1 : vector<8x256xf32>, i32 -> vector<8x256xf32>
    %c7_44 = arith.constant 7 : index
    %c0_45 = arith.constant 0 : index
    %93 = vector.load %arg2[%c7_44, %c0_45] : memref<9x256xf32, #tpu.memory_space<vmem>>, vector<1x256xf32>
    %94 = vector.broadcast %93 : vector<1x256xf32> to vector<8x256xf32>
    %95 = arith.mulf %92, %94 : vector<8x256xf32>
    %96 = tpu.concatenate %67, %71, %75, %79, %63, %83, %87, %91, %95 in 0 : vector<8x256xf32>, vector<8x256xf32>, vector<8x256xf32>, vector<8x256xf32>, vector<8x256xf32>, vector<8x256xf32>, vector<8x256xf32>, vector<8x256xf32>, vector<8x256xf32> -> vector<72x256xf32>
    %97 = arith.truncf %96 : vector<72x256xf32> to vector<72x256xbf16>
    %c0_46 = arith.constant 0 : index
    %c0_47 = arith.constant 0 : index
    %98 = vector.load %arg5[%c0_46, %c0_47] : memref<8x72xbf16, #tpu.memory_space<vmem>>, vector<8x72xbf16>
    %cst_48 = arith.constant dense<0.000000e+00> : vector<8x256xf32>
    %99 = tpu.matmul %98, %97, %cst_48 {dimension_numbers = #tpu.dot_dimension_numbers<[1], [0], [0], [1], [0, 0, 1, 1], [], []>} : vector<8x72xbf16>, vector<72x256xbf16>, vector<8x256xf32> -> vector<8x256xf32>
    %c0_49 = arith.constant 0 : index
    %c0_50 = arith.constant 0 : index
    %100 = vector.load %arg6[%c0_49, %c0_50] : memref<8x1xf32, #tpu.memory_space<vmem>>, vector<8x1xf32>
    %101 = vector.broadcast %100 : vector<8x1xf32> to vector<8x256xf32>
    %102 = arith.addf %99, %101 : vector<8x256xf32>
    %103 = arith.addf %102, %1 : vector<8x256xf32>
    %cst_51 = arith.constant dense<0.000000e+00> : vector<8xf32>
    %104 = vector.multi_reduction <add>, %103, %cst_51 [1] : vector<8x256xf32> to vector<8xf32>
    %105 = vector.shape_cast %104 : vector<8xf32> to vector<8x1xf32>
    %106 = arith.mulf %103, %103 : vector<8x256xf32>
    %cst_52 = arith.constant dense<0.000000e+00> : vector<8xf32>
    %107 = vector.multi_reduction <add>, %106, %cst_52 [1] : vector<8x256xf32> to vector<8xf32>
    %108 = vector.shape_cast %107 : vector<8xf32> to vector<8x1xf32>
    %cst_53 = arith.constant 3.906250e-03 : f32
    %109 = vector.broadcast %cst_53 : f32 to vector<8x1xf32>
    %110 = arith.mulf %105, %109 : vector<8x1xf32>
    %cst_54 = arith.constant 3.906250e-03 : f32
    %111 = vector.broadcast %cst_54 : f32 to vector<8x1xf32>
    %112 = arith.mulf %108, %111 : vector<8x1xf32>
    %113 = arith.mulf %110, %110 : vector<8x1xf32>
    %114 = arith.subf %112, %113 : vector<8x1xf32>
    %cst_55 = arith.constant 0.000000e+00 : f32
    %115 = vector.broadcast %cst_55 : f32 to vector<8x1xf32>
    %116 = arith.maximumf %114, %115 : vector<8x1xf32>
    %cst_56 = arith.constant 9.99999974E-6 : f32
    %117 = vector.broadcast %cst_56 : f32 to vector<8x1xf32>
    %118 = arith.addf %116, %117 : vector<8x1xf32>
    %119 = math.rsqrt %118 : vector<8x1xf32>
    %120 = vector.broadcast %119 : vector<8x1xf32> to vector<8x256xf32>
    %121 = arith.mulf %103, %120 : vector<8x256xf32>
    %122 = arith.mulf %110, %119 : vector<8x1xf32>
    %123 = vector.broadcast %122 : vector<8x1xf32> to vector<8x256xf32>
    %124 = arith.subf %121, %123 : vector<8x256xf32>
    %cst_57 = arith.constant 0.000000e+00 : f32
    %125 = vector.broadcast %cst_57 : f32 to vector<8x256xf32>
    %126 = arith.maximumf %124, %125 : vector<8x256xf32>
    %c0_58 = arith.constant 0 : index
    %c0_59 = arith.constant 0 : index
    %c0_60 = arith.constant 0 : index
    %127 = vector.load %arg7[%c0_58, %c0_59, %c0_60] : memref<1x8x256xf32, #tpu.memory_space<vmem>>, vector<1x8x256xf32>
    %128 = vector.shape_cast %127 : vector<1x8x256xf32> to vector<8x256xf32>
    %129 = vector.shape_cast %126 : vector<8x256xf32> to vector<1x8x256xf32>
    tpu.vector_store %arg7[%c0_58, %c0_59, %c0_60], %129 {strides = array<i32>} : memref<1x8x256xf32, #tpu.memory_space<vmem>>, vector<1x8x256xf32>,
    return
  }
  func.func @transform_0(%arg0: i32) -> (i32, i32, i32) {
    %c0_i32 = arith.constant 0 : i32
    %c0_i32_0 = arith.constant 0 : i32
    %c0_i32_1 = arith.constant 0 : i32
    return %arg0, %c0_i32, %c0_i32_0 : i32, i32, i32
  }
  func.func @transform_1(%arg0: i32) -> (i32, i32) {
    %c0_i32 = arith.constant 0 : i32
    %c0_i32_0 = arith.constant 0 : i32
    %c0_i32_1 = arith.constant 0 : i32
    return %c0_i32, %c0_i32_0 : i32, i32
  }
  func.func @transform_2(%arg0: i32) -> (i32, i32) {
    %c0_i32 = arith.constant 0 : i32
    %c0_i32_0 = arith.constant 0 : i32
    %c0_i32_1 = arith.constant 0 : i32
    return %c0_i32, %c0_i32_0 : i32, i32
  }
  func.func @transform_3(%arg0: i32) -> (i32, i32) {
    %c0_i32 = arith.constant 0 : i32
    %c0_i32_0 = arith.constant 0 : i32
    %c0_i32_1 = arith.constant 0 : i32
    return %c0_i32, %c0_i32_0 : i32, i32
  }
  func.func @transform_4(%arg0: i32) -> (i32, i32) {
    %c0_i32 = arith.constant 0 : i32
    %c0_i32_0 = arith.constant 0 : i32
    %c0_i32_1 = arith.constant 0 : i32
    return %c0_i32, %c0_i32_0 : i32, i32
  }
  func.func @transform_5(%arg0: i32) -> (i32, i32) {
    %c0_i32 = arith.constant 0 : i32
    %c0_i32_0 = arith.constant 0 : i32
    %c0_i32_1 = arith.constant 0 : i32
    return %c0_i32, %c0_i32_0 : i32, i32
  }
  func.func @transform_6(%arg0: i32) -> (i32, i32, i32) {
    %c0_i32 = arith.constant 0 : i32
    %c0_i32_0 = arith.constant 0 : i32
    %c0_i32_1 = arith.constant 0 : i32
    return %arg0, %c0_i32, %c0_i32_0 : i32, i32, i32
  }
}

</mosaic_0001>

<llo_original>
// kernel: resblock_forward.1
$region0: #{resblock_forward.1}
  #allocation0 [shape = 'u32[]', space=smem, size = 0x4, offset = 0x4, fixed_abs, tag = 'smem constant byte address 0x4 - core index']
  #allocation1 [shape = 'u32[144,128]{1,0:T(1,128)}', space=vmem, size = 0x12000, scoped, tag = 'internal scratch']
  %s0 = inlined_call_operand.vmem [shape: f32[2,8,256], index: 0, kind: input, shape index: {}]
  %s1 = inlined_call_operand.vmem [shape: f32[9,256], index: 1, kind: input, shape index: {}]
  %s2 = inlined_call_operand.vmem [shape: bf16[8,72], index: 2, kind: input, shape index: {}]
  %s3 = inlined_call_operand.vmem [shape: f32[8,1], index: 3, kind: input, shape index: {}]
  %s4 = inlined_call_operand.vmem [shape: bf16[8,72], index: 4, kind: input, shape index: {}]
  %s5 = inlined_call_operand.vmem [shape: f32[8,1], index: 5, kind: input, shape index: {}]
  %s6 = inlined_call_operand.vmem [shape: f32[2,8,256], index: 6, kind: output, shape index: {}]
  %s7 = sld [smem:[#allocation0]]
  $region57: #{resblock_forward.1} parent=0
    _
  %s9 = ssub.s32 1, %s7
  %s10 = scalar_select 0, %s9, %s7
  loop: start=0, step=1, limit=4
  $region2: #{resblock_forward.1} parent=0 // loop_pre_header
    _
  $region3: #{resblock_forward.1} parent=0 // loop_header
    %s12 = sphi 0, %s16
    %p13 = scmp.ge.s32.totalorder %s12, 4
    %s22 = sphi 0, %s24
    %s25 = sphi 0, %s22
    %s26 = sphi 0, %s25
    %s42 = sphi 0, %s26
    %s46 = sphi 0, %s46
    %s48 = sphi 0, %s46
    %s49 = sphi 0, %s48
    %s63 = sphi 0, %s49
    %s67 = sphi 0, %s67
    %s69 = sphi 0, %s67
    %s70 = sphi 0, %s69
    %s84 = sphi 0, %s70
    %s88 = sphi 0, %s88
    %s90 = sphi 0, %s88
    %s91 = sphi 0, %s90
    %s105 = sphi 0, %s91
    %s109 = sphi 0, %s109
    %s111 = sphi 0, %s109
    %s112 = sphi 0, %s111
    %s126 = sphi 0, %s112
    %s130 = sphi 0, %s130
    %s132 = sphi 0, %s130
    %s133 = sphi 0, %s132
    %s147 = sphi 0, %s133
    %s153 = sphi 0, %s155
    %s156 = sphi 0, %s153
    %s157 = sphi 0, %s156
    %s173 = sphi 0, %s157
  $region4: #{resblock_forward.1} parent=0 // loop_header_branch
    %15 = sbr.rel (%p13) target = $region8
  $region5: #{resblock_forward.1} parent=0 // loop_body
    %s17 = ssub.s32 %s12, 1
    %s18 = ssub.s32 %s12, 2
    %s19 = sadd.s32 %s12, 1
    %s20 = ssub.s32 %s12, %s19
    %p21 = scmp.eq.s32.totalorder %s20, 0
    %s23 = sadd.s32 %s22, 1
    %s24 = scalar_select %p21, %s22, %s23
    %p27 = pneg %p21
    %p28 = scmp.eq.s32.totalorder %s12, 1
    %p29 = por %p27, %p28
    %p30 = scmp.ne.s32.totalorder %s22, %s25
    %p31 = scmp.eq.s32.totalorder %s12, 0
    %p32 = por %p30, %p31
    %p33 = scmp.ne.s32.totalorder %s22, %s25
    %p34 = scmp.eq.s32.totalorder %s17, 1
    %p35 = por %p33, %p34
    %p36 = scmp.ne.s32.totalorder %s25, %s26
    %p37 = scmp.eq.s32.totalorder %s17, 0
    %p38 = por %p36, %p37
    %p39 = scmp.ne.s32.totalorder %s25, %s26
    %p40 = scmp.eq.s32.totalorder %s18, 1
    %p41 = por %p39, %p40
    %p43 = scmp.ne.s32.totalorder %s26, %s42
    %p44 = scmp.eq.s32.totalorder %s18, 0
    %p45 = por %p43, %p44
    %s47 = sadd.s32 %s46, 1
    %p50 = scmp.eq.s32.totalorder %s12, 1
    %p51 = scmp.ne.s32.totalorder %s46, %s48
    %p52 = scmp.eq.s32.totalorder %s12, 0
    %p53 = por %p51, %p52
    %p54 = scmp.ne.s32.totalorder %s46, %s48
    %p55 = scmp.eq.s32.totalorder %s17, 1
    %p56 = por %p54, %p55
    %p57 = scmp.ne.s32.totalorder %s48, %s49
    %p58 = scmp.eq.s32.totalorder %s17, 0
    %p59 = por %p57, %p58
    %p60 = scmp.ne.s32.totalorder %s48, %s49
    %p61 = scmp.eq.s32.totalorder %s18, 1
    %p62 = por %p60, %p61
    %p64 = scmp.ne.s32.totalorder %s49, %s63
    %p65 = scmp.eq.s32.totalorder %s18, 0
    %p66 = por %p64, %p65
    %s68 = sadd.s32 %s67, 1
    %p71 = scmp.eq.s32.totalorder %s12, 1
    %p72 = scmp.ne.s32.totalorder %s67, %s69
    %p73 = scmp.eq.s32.totalorder %s12, 0
    %p74 = por %p72, %p73
    %p75 = scmp.ne.s32.totalorder %s67, %s69
    %p76 = scmp.eq.s32.totalorder %s17, 1
    %p77 = por %p75, %p76
    %p78 = scmp.ne.s32.totalorder %s69, %s70
    %p79 = scmp.eq.s32.totalorder %s17, 0
    %p80 = por %p78, %p79
    %p81 = scmp.ne.s32.totalorder %s69, %s70
    %p82 = scmp.eq.s32.totalorder %s18, 1
    %p83 = por %p81, %p82
    %p85 = scmp.ne.s32.totalorder %s70, %s84
    %p86 = scmp.eq.s32.totalorder %s18, 0
    %p87 = por %p85, %p86
    %s89 = sadd.s32 %s88, 1
    %p92 = scmp.eq.s32.totalorder %s12, 1
    %p93 = scmp.ne.s32.totalorder %s88, %s90
    %p94 = scmp.eq.s32.totalorder %s12, 0
    %p95 = por %p93, %p94
    %p96 = scmp.ne.s32.totalorder %s88, %s90
    %p97 = scmp.eq.s32.totalorder %s17, 1
    %p98 = por %p96, %p97
    %p99 = scmp.ne.s32.totalorder %s90, %s91
    %p100 = scmp.eq.s32.totalorder %s17, 0
    %p101 = por %p99, %p100
    %p102 = scmp.ne.s32.totalorder %s90, %s91
    %p103 = scmp.eq.s32.totalorder %s18, 1
    %p104 = por %p102, %p103
    %p106 = scmp.ne.s32.totalorder %s91, %s105
    %p107 = scmp.eq.s32.totalorder %s18, 0
    %p108 = por %p106, %p107
    %s110 = sadd.s32 %s109, 1
    %p113 = scmp.eq.s32.totalorder %s12, 1
    %p114 = scmp.ne.s32.totalorder %s109, %s111
    %p115 = scmp.eq.s32.totalorder %s12, 0
    %p116 = por %p114, %p115
    %p117 = scmp.ne.s32.totalorder %s109, %s111
    %p118 = scmp.eq.s32.totalorder %s17, 1
    %p119 = por %p117, %p118
    %p120 = scmp.ne.s32.totalorder %s111, %s112
    %p121 = scmp.eq.s32.totalorder %s17, 0
    %p122 = por %p120, %p121
    %p123 = scmp.ne.s32.totalorder %s111, %s112
    %p124 = scmp.eq.s32.totalorder %s18, 1
    %p125 = por %p123, %p124
    %p127 = scmp.ne.s32.totalorder %s112, %s126
    %p128 = scmp.eq.s32.totalorder %s18, 0
    %p129 = por %p127, %p128
    %s131 = sadd.s32 %s130, 1
    %p134 = scmp.eq.s32.totalorder %s12, 1
    %p135 = scmp.ne.s32.totalorder %s130, %s132
    %p136 = scmp.eq.s32.totalorder %s12, 0
    %p137 = por %p135, %p136
    %p138 = scmp.ne.s32.totalorder %s130, %s132
    %p139 = scmp.eq.s32.totalorder %s17, 1
    %p140 = por %p138, %p139
    %p141 = scmp.ne.s32.totalorder %s132, %s133
    %p142 = scmp.eq.s32.totalorder %s17, 0
    %p143 = por %p141, %p142
    %p144 = scmp.ne.s32.totalorder %s132, %s133
    %p145 = scmp.eq.s32.totalorder %s18, 1
    %p146 = por %p144, %p145
    %p148 = scmp.ne.s32.totalorder %s133, %s147
    %p149 = scmp.eq.s32.totalorder %s18, 0
    %p150 = por %p148, %p149
    %s151 = ssub.s32 %s12, %s19
    %p152 = scmp.eq.s32.totalorder %s151, 0
    %s154 = sadd.s32 %s153, 1
    %s155 = scalar_select %p152, %s153, %s154
    %p158 = pneg %p152
    %p159 = scmp.eq.s32.totalorder %s12, 1
    %p160 = por %p158, %p159
    %p161 = scmp.ne.s32.totalorder %s153, %s156
    %p162 = scmp.eq.s32.totalorder %s12, 0
    %p163 = por %p161, %p162
    %p164 = scmp.ne.s32.totalorder %s153, %s156
    %p165 = scmp.eq.s32.totalorder %s17, 1
    %p166 = por %p164, %p165
    %p167 = scmp.ne.s32.totalorder %s156, %s157
    %p168 = scmp.eq.s32.totalorder %s17, 0
    %p169 = por %p167, %p168
    %p170 = scmp.ne.s32.totalorder %s156, %s157
    %p171 = scmp.eq.s32.totalorder %s18, 1
    %p172 = por %p170, %p171
    %p174 = scmp.ne.s32.totalorder %s157, %s173
    %p175 = scmp.eq.s32.totalorder %s18, 0
    %p176 = por %p174, %p175
    %p177 = scmp.le.s32.totalorder 1, %s12
    %p178 = scmp.lt.s32.totalorder %s12, 3
    %p179 = pnand %p177, %p178
    %p180 = pneg %p179
    // Predicated region
    $region9: #{resblock_forward.1} parent=5 // pred_check
      _
    $region10: #{resblock_forward.1} parent=5 // pred_check_branch
      %182 = sbr.rel (%p179) target = $region12
    $region11: #{resblock_forward.1} parent=5 // pred_region
      %s183 = ssub.s32 %s12, 1
      // Predicated region
      $region13: #{resblock_forward.1} parent=11 // pred_check
        %p184 = pneg %p59
      $region14: #{resblock_forward.1} parent=11 // pred_check_branch
        %186 = sbr.rel (%p184) target = $region16
      $region15: #{resblock_forward.1} parent=11 // pred_region
        _
      $region16: #{resblock_forward.1} parent=11 // pred_fallthru
        _
      // Predicated region
      $region17: #{resblock_forward.1} parent=11 // pred_check
        %p187 = pneg %p80
      $region18: #{resblock_forward.1} parent=11 // pred_check_branch
        %189 = sbr.rel (%p187) target = $region20
      $region19: #{resblock_forward.1} parent=11 // pred_region
        _
      $region20: #{resblock_forward.1} parent=11 // pred_fallthru
        _
      // Predicated region
      $region21: #{resblock_forward.1} parent=11 // pred_check
        %p190 = pneg %p101
      $region22: #{resblock_forward.1} parent=11 // pred_check_branch
        %192 = sbr.rel (%p190) target = $region24
      $region23: #{resblock_forward.1} parent=11 // pred_region
        _
      $region24: #{resblock_forward.1} parent=11 // pred_fallthru
        _
      // Predicated region
      $region25: #{resblock_forward.1} parent=11 // pred_check
        %p193 = pneg %p122
      $region26: #{resblock_forward.1} parent=11 // pred_check_branch
        %195 = sbr.rel (%p193) target = $region28
      $region27: #{resblock_forward.1} parent=11 // pred_region
        _
      $region28: #{resblock_forward.1} parent=11 // pred_fallthru
        _
      // Predicated region
      $region29: #{resblock_forward.1} parent=11 // pred_check
        %p196 = pneg %p143
      $region30: #{resblock_forward.1} parent=11 // pred_check_branch
        %198 = sbr.rel (%p196) target = $region32
      $region31: #{resblock_forward.1} parent=11 // pred_region
        _
      $region32: #{resblock_forward.1} parent=11 // pred_fallthru
        _
    $region12: #{resblock_forward.1} parent=5 // pred_fallthru
      _
    %p199 = scmp.lt.s32.totalorder %s12, 2
    // Predicated region
    $region33: #{resblock_forward.1} parent=5 // pred_check
      %p200 = pneg %p199
    $region34: #{resblock_forward.1} parent=5 // pred_check_branch
      %202 = sbr.rel (%p200) target = $region36
    $region35: #{resblock_forward.1} parent=5 // pred_region
      // Predicated region
      $region37: #{resblock_forward.1} parent=35 // pred_check
        %p203 = pneg %p32
      $region38: #{resblock_forward.1} parent=35 // pred_check_branch
        %205 = sbr.rel (%p203) target = $region40
      $region39: #{resblock_forward.1} parent=35 // pred_region
        %p206 = scmp.lt.s32.totalorder %s12, 1
        %s207 = scalar_select %p206, %s12, 1
        %s208 = smul.addr %s207, 2
        %s209 = smul.addr %s208, 8
        %s210 = scalar_lea.vmem %s0, %s209
      $region40: #{resblock_forward.1} parent=35 // pred_fallthru
        _
    $region36: #{resblock_forward.1} parent=5 // pred_fallthru
      _
    %p211 = scmp.le.s32.totalorder 1, %s12
    %p212 = scmp.lt.s32.totalorder %s12, 3
    %p213 = pnand %p211, %p212
    %p214 = pneg %p213
    // Predicated region
    $region41: #{resblock_forward.1} parent=5 // pred_check
      _
    $region42: #{resblock_forward.1} parent=5 // pred_check_branch
      %216 = sbr.rel (%p213) target = $region44
    $region43: #{resblock_forward.1} parent=5 // pred_region
      %s217 = ssub.s32 %s12, 1
      %p218 = scmp.lt.s32.totalorder %s17, 1
      %s219 = scalar_select %p218, %s17, 1
      %s220 = smul.addr %s219, 2
      %s221 = smul.addr %s220, 8
      %s222 = scalar_lea.vmem %s0, %s221
      %p223 = pneg %p38
      %p224 = pneg %p35
      %p225 = pneg %p59
      %p226 = pneg %p56
      %p227 = pneg %p80
      %p228 = pneg %p77
      %p229 = pneg %p101
      %p230 = pneg %p98
      %p231 = pneg %p122
      %p232 = pneg %p119
      %p233 = pneg %p143
      %p234 = pneg %p140
      %p235 = pneg %p169
      %p236 = pneg %p166
      %p237 = scmp.lt.s32.totalorder %s17, 1
      %s238 = scalar_select %p237, %s17, 1
      %s239 = smul.addr %s238, 2
      %s240 = smul.addr %s239, 8
      %s241 = scalar_lea.vmem %s6, %s240
      %p242 = scmp.lt.s32.totalorder %s17, 1
      %s243 = scalar_select %p242, %s17, 1
      %s244 = smul.addr %s243, 2
      %s245 = smul.addr %s244, 8
      %s246 = scalar_lea.vmem %s0, %s245
      %p247 = scmp.lt.s32.totalorder %s17, 1
      %s248 = scalar_select %p247, %s17, 1
      %s249 = smul.addr %s248, 2
      %s250 = smul.addr %s249, 8
      %s251 = scalar_lea.vmem %s6, %s250
      %v253 = vld [vmem:[%s246] sm:$0xff]
      %v254 = vld [vmem:[%s246 + $0x8] sm:$0xff]
      %255 = vrot.lane.b32.xlu0 %v253, 17
      %v256 = vpop.permute.xlu0 %255
      %257 = vrot.lane.b32.xlu0 %v254, 17
      %v258 = vpop.permute.xlu0 %257
      %v259 = vlaneseq
      %v260 = vand.u32 %v259, 127
      %vm261 = vcmp.lt.s32.totalorder %v260, 17
      %v262 = vsel %vm261, %v256, %v258
      %v263 = vsel %vm261, %v258, %v256
      %v264 = vld [vmem:[%s1] ss:$8 sm:$0x3]
      %v266 = vlaneseq
      %v267 = vshrl.u32 %v266, 7
      %v268 = vsub.s32 0, %v267
      %v269 = vrot.slane %v264, %v268
      %v270 = vlaneseq
      %v271 = vshrl.u32 %v270, 7
      %v272 = vsub.s32 1, %v271
      %v273 = vrot.slane %v264, %v272
      %v276 = vmul.f32 %v263, %v269
      %v277 = vmul.f32 %v262, %v273
      %278 = vrot.lane.b32.xlu0 %v253, 16
      %v279 = vpop.permute.xlu0 %278
      %280 = vrot.lane.b32.xlu0 %v254, 16
      %v281 = vpop.permute.xlu0 %280
      %vm282 = vcmp.lt.s32.totalorder %v260, 16
      %v283 = vsel %vm282, %v279, %v281
      %v284 = vsel %vm282, %v281, %v279
      %s285 = scalar_lea.vmem %s1, 1
      %v286 = vld [vmem:[%s285] ss:$8 sm:$0x3]
      %v288 = vlaneseq
      %v289 = vshrl.u32 %v288, 7
      %v290 = vsub.s32 0, %v289
      %v291 = vrot.slane %v286, %v290
      %v292 = vlaneseq
      %v293 = vshrl.u32 %v292, 7
      %v294 = vsub.s32 1, %v293
      %v295 = vrot.slane %v286, %v294
      %v298 = vmul.f32 %v284, %v291
      %v299 = vmul.f32 %v283, %v295
      %300 = vrot.lane.b32.xlu0 %v253, 15
      %v301 = vpop.permute.xlu0 %300
      %302 = vrot.lane.b32.xlu0 %v254, 15
      %v303 = vpop.permute.xlu0 %302
      %vm304 = vcmp.lt.s32.totalorder %v260, 15
      %v305 = vsel %vm304, %v301, %v303
      %v306 = vsel %vm304, %v303, %v301
      %s307 = scalar_lea.vmem %s1, 2
      %v308 = vld [vmem:[%s307] ss:$8 sm:$0x3]
      %v310 = vlaneseq
      %v311 = vshrl.u32 %v310, 7
      %v312 = vsub.s32 0, %v311
      %v313 = vrot.slane %v308, %v312
      %v314 = vlaneseq
      %v315 = vshrl.u32 %v314, 7
      %v316 = vsub.s32 1, %v315
      %v317 = vrot.slane %v308, %v316
      %v320 = vmul.f32 %v306, %v313
      %v321 = vmul.f32 %v305, %v317
      %322 = vrot.lane.b32.xlu0 %v253, 1
      %v323 = vpop.permute.xlu0 %322
      %324 = vrot.lane.b32.xlu0 %v254, 1
      %v325 = vpop.permute.xlu0 %324
      %vm326 = vcmp.lt.s32.totalorder %v260, 1
      %v327 = vsel %vm326, %v323, %v325
      %v328 = vsel %vm326, %v325, %v323
      %s329 = scalar_lea.vmem %s1, 3
      %v330 = vld [vmem:[%s329] ss:$8 sm:$0x3]
      %v332 = vlaneseq
      %v333 = vshrl.u32 %v332, 7
      %v334 = vsub.s32 0, %v333
      %v335 = vrot.slane %v330, %v334
      %v336 = vlaneseq
      %v337 = vshrl.u32 %v336, 7
      %v338 = vsub.s32 1, %v337
      %v339 = vrot.slane %v330, %v338
      %v342 = vmul.f32 %v328, %v335
      %v343 = vmul.f32 %v327, %v339
      %344 = vrot.lane.b32.xlu0 %v253, 127
      %v345 = vpop.permute.xlu0 %344
      %346 = vrot.lane.b32.xlu0 %v254, 127
      %v347 = vpop.permute.xlu0 %346
      %vm348 = vcmp.lt.s32.totalorder %v260, 127
      %v349 = vsel %vm348, %v345, %v347
      %v350 = vsel %vm348, %v347, %v345
      %s351 = scalar_lea.vmem %s1, 4
      %v352 = vld [vmem:[%s351] ss:$8 sm:$0x3]
      %v354 = vlaneseq
      %v355 = vshrl.u32 %v354, 7
      %v356 = vsub.s32 0, %v355
      %v357 = vrot.slane %v352, %v356
      %v358 = vlaneseq
      %v359 = vshrl.u32 %v358, 7
      %v360 = vsub.s32 1, %v359
      %v361 = vrot.slane %v352, %v360
      %v364 = vmul.f32 %v349, %v357
      %v365 = vmul.f32 %v350, %v361
      %366 = vrot.lane.b32.xlu0 %v253, 113
      %v367 = vpop.permute.xlu0 %366
      %368 = vrot.lane.b32.xlu0 %v254, 113
      %v369 = vpop.permute.xlu0 %368
      %vm370 = vcmp.lt.s32.totalorder %v260, 113
      %v371 = vsel %vm370, %v367, %v369
      %v372 = vsel %vm370, %v369, %v367
      %s373 = scalar_lea.vmem %s1, 5
      %v374 = vld [vmem:[%s373] ss:$8 sm:$0x3]
      %v376 = vlaneseq
      %v377 = vshrl.u32 %v376, 7
      %v378 = vsub.s32 0, %v377
      %v379 = vrot.slane %v374, %v378
      %v380 = vlaneseq
      %v381 = vshrl.u32 %v380, 7
      %v382 = vsub.s32 1, %v381
      %v383 = vrot.slane %v374, %v382
      %v386 = vmul.f32 %v371, %v379
      %v387 = vmul.f32 %v372, %v383
      %388 = vrot.lane.b32.xlu0 %v253, 112
      %v389 = vpop.permute.xlu0 %388
      %390 = vrot.lane.b32.xlu0 %v254, 112
      %v391 = vpop.permute.xlu0 %390
      %vm392 = vcmp.lt.s32.totalorder %v260, 112
      %v393 = vsel %vm392, %v389, %v391
      %v394 = vsel %vm392, %v391, %v389
      %s395 = scalar_lea.vmem %s1, 6
      %v396 = vld [vmem:[%s395] ss:$8 sm:$0x3]
      %v398 = vlaneseq
      %v399 = vshrl.u32 %v398, 7
      %v400 = vsub.s32 0, %v399
      %v401 = vrot.slane %v396, %v400
      %v402 = vlaneseq
      %v403 = vshrl.u32 %v402, 7
      %v404 = vsub.s32 1, %v403
      %v405 = vrot.slane %v396, %v404
      %v408 = vmul.f32 %v393, %v401
      %v409 = vmul.f32 %v394, %v405
      %410 = vrot.lane.b32.xlu0 %v253, 111
      %v411 = vpop.permute.xlu0 %410
      %412 = vrot.lane.b32.xlu0 %v254, 111
      %v413 = vpop.permute.xlu0 %412
      %vm414 = vcmp.lt.s32.totalorder %v260, 111
      %v415 = vsel %vm414, %v411, %v413
      %v416 = vsel %vm414, %v413, %v411
      %s417 = scalar_lea.vmem %s1, 7
      %v418 = vld [vmem:[%s417] ss:$8 sm:$0x3]
      %v420 = vlaneseq
      %v421 = vshrl.u32 %v420, 7
      %v422 = vsub.s32 0, %v421
      %v423 = vrot.slane %v418, %v422
      %v424 = vlaneseq
      %v425 = vshrl.u32 %v424, 7
      %v426 = vsub.s32 1, %v425
      %v427 = vrot.slane %v418, %v426
      %v430 = vmul.f32 %v415, %v423
      %v431 = vmul.f32 %v416, %v427
      %v432 = vpack.c.bf16 %v298, %v276
      %v433 = vpack.c.bf16 %v299, %v277
      %v434 = vpack.c.bf16 %v342, %v320
      %v435 = vpack.c.bf16 %v343, %v321
      %v436 = vpack.c.bf16 %v364, %v253
      %v437 = vpack.c.bf16 %v365, %v254
      %v438 = vpack.c.bf16 %v408, %v386
      %v439 = vpack.c.bf16 %v409, %v387
      %v440 = vpack.c.bf16 %v430, %v430
      %v441 = vpack.c.bf16 %v431, %v431
      %v442 = vld [vmem:[%s2] sm:$0xf]
      %v443 = vld [vmem:[%s3] sm:$0xff]
      %445 = vset.pattern.permute.xlu0 0
      %446 = vperm.xlu0 %445, %v443
      %v447 = vpop.permute.xlu0 %446
      %vm449 = vcmask 588800
      %v451 = vsel %vm449, %v442, 0
      %vm453 = vcmask 1043456
      %v455 = vsel %vm453, %v440, 0
      %v458 = vsel %vm453, %v441, 0
      %460 = vmatprep.subr.bf16.mxu0 %v433
      %461 = vmatpush1.bf16.msra.mxu0 %v432
      %462 = vmatprep.subr.bf16.mxu0 %v435
      %463 = vmatpush1.bf16.msra.mxu0 %v434
      %464 = vmatprep.subr.bf16.mxu0 %v437
      %465 = vmatpush1.bf16.msra.mxu0 %v436
      %466 = vmatprep.subr.bf16.mxu0 %v439
      %467 = vmatpush1.bf16.msra.mxu0 %v438
      %468 = vmatprep.subr.bf16.mxu0 %v458
      %469 = vmatpush1.bf16.msra.mxu0 %v455
      %470 = vmatprep.subr.bf16.mxu0 0
      %471 = vmatpush1.bf16.msra.mxu0 0
      %472 = vmatprep.subr.bf16.mxu0 0
      %473 = vmatpush1.bf16.msra.mxu0 0
      %474 = vmatprep.subr.bf16.mxu0 0
      %475 = vmatpush1.bf16.msra.mxu0 0
      %476 = vmatprep.subr.bf16.mxu0 0
      %477 = vmatpush1.bf16.msra.mxu0 0
      %478 = vmatprep.subr.bf16.mxu0 0
      %479 = vmatpush1.bf16.msra.mxu0 0
      %480 = vmatprep.subr.bf16.mxu0 0
      %481 = vmatpush1.bf16.msra.mxu0 0
      %482 = vmatprep.subr.bf16.mxu0 0
      %483 = vmatpush1.bf16.msra.mxu0 0
      %484 = vmatprep.subr.bf16.mxu0 0
      %485 = vmatpush1.bf16.msra.mxu0 0
      %486 = vmatprep.subr.bf16.mxu0 0
      %487 = vmatpush1.bf16.msra.mxu0 0
      %488 = vmatprep.subr.bf16.mxu0 0
      %489 = vmatpush1.bf16.msra.mxu0 0
      %490 = vmatprep.subr.bf16.mxu0 0
      %491 = vmatpush1.bf16.msra.mxu0 0
      %492 = vmatprep.mubr.bf16.mxu0 0
      %493 = vmatmul.mubr.bf16.gmra.mrb[0].mxu0 %v451
      %v494 = vpop.f32.mrb[0].mxu0
      %v495 = vadd.f32 %v447, %v494
      %v496 = vpop.f32.mrb[0].mxu0
      %v497 = vadd.f32 %v447, %v496
      %v498 = vpop.f32.mrb[0].mxu0
      %v499 = vpop.f32.mrb[0].mxu0
      %500 = vdwg.mxu0
      %v501 = vadd.f32 %v495, %v497
      %502 = vadd.xlane.f32.xlu0 %v501
      %v503 = vpop.xlane.xlu0 %502
      %v504 = vmul.f32 %v495, %v495
      %v505 = vmul.f32 %v497, %v497
      %v506 = vadd.f32 %v504, %v505
      %507 = vadd.xlane.f32.xlu0 %v506
      %v508 = vpop.xlane.xlu0 %507
      %v509 = vmul.f32 %v503, 0.00390625
      %v510 = vmul.f32 %v508, 0.00390625
      %v511 = vmul.f32 %v509, %v509
      %v512 = vsub.f32 %v510, %v511
      %v513 = vmax.f32 %v512, 0.0
      %v514 = vadd.f32 %v513, 1e-05
      %v515 = vrsqrt.pop %v514
      %v516 = vmul.f32 %v495, %v515
      %v517 = vmul.f32 %v497, %v515
      %v518 = vmul.f32 %v509, %v515
      %v519 = vsub.f32 %v516, %v518
      %v520 = vsub.f32 %v517, %v518
      %v521 = vmax.f32 %v519, 0.0
      %v522 = vmax.f32 %v520, 0.0
      %523 = vrot.lane.b32.xlu0 %v521, 17
      %v524 = vpop.permute.xlu0 %523
      %525 = vrot.lane.b32.xlu0 %v522, 17
      %v526 = vpop.permute.xlu0 %525
      %v527 = vsel %vm261, %v524, %v526
      %v528 = vsel %vm261, %v526, %v524
      %v529 = vmul.f32 %v528, %v269
      %v530 = vmul.f32 %v527, %v273
      %531 = vrot.lane.b32.xlu0 %v521, 16
      %v532 = vpop.permute.xlu0 %531
      %533 = vrot.lane.b32.xlu0 %v522, 16
      %v534 = vpop.permute.xlu0 %533
      %v535 = vsel %vm282, %v532, %v534
      %v536 = vsel %vm282, %v534, %v532
      %v537 = vmul.f32 %v536, %v291
      %v538 = vmul.f32 %v535, %v295
      %539 = vrot.lane.b32.xlu0 %v521, 15
      %v540 = vpop.permute.xlu0 %539
      %541 = vrot.lane.b32.xlu0 %v522, 15
      %v542 = vpop.permute.xlu0 %541
      %v543 = vsel %vm304, %v540, %v542
      %v544 = vsel %vm304, %v542, %v540
      %v545 = vmul.f32 %v544, %v313
      %v546 = vmul.f32 %v543, %v317
      %547 = vrot.lane.b32.xlu0 %v521, 1
      %v548 = vpop.permute.xlu0 %547
      %549 = vrot.lane.b32.xlu0 %v522, 1
      %v550 = vpop.permute.xlu0 %549
      %v551 = vsel %vm326, %v548, %v550
      %v552 = vsel %vm326, %v550, %v548
      %v553 = vmul.f32 %v552, %v335
      %v554 = vmul.f32 %v551, %v339
      %555 = vrot.lane.b32.xlu0 %v521, 127
      %v556 = vpop.permute.xlu0 %555
      %557 = vrot.lane.b32.xlu0 %v522, 127
      %v558 = vpop.permute.xlu0 %557
      %v559 = vsel %vm348, %v556, %v558
      %v560 = vsel %vm348, %v558, %v556
      %v561 = vmul.f32 %v559, %v357
      %v562 = vmul.f32 %v560, %v361
      %563 = vrot.lane.b32.xlu0 %v521, 113
      %v564 = vpop.permute.xlu0 %563
      %565 = vrot.lane.b32.xlu0 %v522, 113
      %v566 = vpop.permute.xlu0 %565
      %v567 = vsel %vm370, %v564, %v566
      %v568 = vsel %vm370, %v566, %v564
      %v569 = vmul.f32 %v567, %v379
      %v570 = vmul.f32 %v568, %v383
      %571 = vrot.lane.b32.xlu0 %v521, 112
      %v572 = vpop.permute.xlu0 %571
      %573 = vrot.lane.b32.xlu0 %v522, 112
      %v574 = vpop.permute.xlu0 %573
      %v575 = vsel %vm392, %v572, %v574
      %v576 = vsel %vm392, %v574, %v572
      %v577 = vmul.f32 %v575, %v401
      %v578 = vmul.f32 %v576, %v405
      %579 = vrot.lane.b32.xlu0 %v521, 111
      %v580 = vpop.permute.xlu0 %579
      %581 = vrot.lane.b32.xlu0 %v522, 111
      %v582 = vpop.permute.xlu0 %581
      %v583 = vsel %vm414, %v580, %v582
      %v584 = vsel %vm414, %v582, %v580
      %v585 = vmul.f32 %v583, %v423
      %v586 = vmul.f32 %v584, %v427
      %v587 = vpack.c.bf16 %v537, %v529
      %v588 = vpack.c.bf16 %v538, %v530
      %v589 = vpack.c.bf16 %v553, %v545
      %v590 = vpack.c.bf16 %v554, %v546
      %v591 = vpack.c.bf16 %v561, %v521
      %v592 = vpack.c.bf16 %v562, %v522
      %v593 = vpack.c.bf16 %v577, %v569
      %v594 = vpack.c.bf16 %v578, %v570
      %v595 = vpack.c.bf16 %v585, %v585
      %v596 = vpack.c.bf16 %v586, %v586
      %v597 = vld [vmem:[%s4] sm:$0xf]
      %v598 = vld [vmem:[%s5] sm:$0xff]
      %600 = vset.pattern.permute.xlu0 0
      %601 = vperm.xlu0 %600, %v598
      %v602 = vpop.permute.xlu0 %601
      %v605 = vsel %vm449, %v597, 0
      %v608 = vsel %vm453, %v595, 0
      %v611 = vsel %vm453, %v596, 0
      %613 = vmatprep.subr.bf16.mxu0 %v588
      %614 = vmatpush1.bf16.msra.mxu0 %v587
      %615 = vmatprep.subr.bf16.mxu0 %v590
      %616 = vmatpush1.bf16.msra.mxu0 %v589
      %617 = vmatprep.subr.bf16.mxu0 %v592
      %618 = vmatpush1.bf16.msra.mxu0 %v591
      %619 = vmatprep.subr.bf16.mxu0 %v594
      %620 = vmatpush1.bf16.msra.mxu0 %v593
      %621 = vmatprep.subr.bf16.mxu0 %v611
      %622 = vmatpush1.bf16.msra.mxu0 %v608
      %623 = vmatprep.subr.bf16.mxu0 0
      %624 = vmatpush1.bf16.msra.mxu0 0
      %625 = vmatprep.subr.bf16.mxu0 0
      %626 = vmatpush1.bf16.msra.mxu0 0
      %627 = vmatprep.subr.bf16.mxu0 0
      %628 = vmatpush1.bf16.msra.mxu0 0
      %629 = vmatprep.subr.bf16.mxu0 0
      %630 = vmatpush1.bf16.msra.mxu0 0
      %631 = vmatprep.subr.bf16.mxu0 0
      %632 = vmatpush1.bf16.msra.mxu0 0
      %633 = vmatprep.subr.bf16.mxu0 0
      %634 = vmatpush1.bf16.msra.mxu0 0
      %635 = vmatprep.subr.bf16.mxu0 0
      %636 = vmatpush1.bf16.msra.mxu0 0
      %637 = vmatprep.subr.bf16.mxu0 0
      %638 = vmatpush1.bf16.msra.mxu0 0
      %639 = vmatprep.subr.bf16.mxu0 0
      %640 = vmatpush1.bf16.msra.mxu0 0
      %641 = vmatprep.subr.bf16.mxu0 0
      %642 = vmatpush1.bf16.msra.mxu0 0
      %643 = vmatprep.subr.bf16.mxu0 0
      %644 = vmatpush1.bf16.msra.mxu0 0
      %645 = vmatprep.mubr.bf16.mxu0 0
      %646 = vmatmul.mubr.bf16.gmra.mrb[0].mxu0 %v605
      %v647 = vpop.f32.mrb[0].mxu0
      %v648 = vadd.f32 %v602, %v647
      %v649 = vpop.f32.mrb[0].mxu0
      %v650 = vadd.f32 %v602, %v649
      %v651 = vpop.f32.mrb[0].mxu0
      %v652 = vpop.f32.mrb[0].mxu0
      %653 = vdwg.mxu0
      %v654 = vadd.f32 %v648, %v253
      %v655 = vadd.f32 %v650, %v254
      %v656 = vadd.f32 %v654, %v655
      %657 = vadd.xlane.f32.xlu0 %v656
      %v658 = vpop.xlane.xlu0 %657
      %v659 = vmul.f32 %v654, %v654
      %v660 = vmul.f32 %v655, %v655
      %v661 = vadd.f32 %v659, %v660
      %662 = vadd.xlane.f32.xlu0 %v661
      %v663 = vpop.xlane.xlu0 %662
      %v664 = vmul.f32 %v658, 0.00390625
      %v665 = vmul.f32 %v663, 0.00390625
      %v666 = vmul.f32 %v664, %v664
      %v667 = vsub.f32 %v665, %v666
      %v668 = vmax.f32 %v667, 0.0
      %v669 = vadd.f32 %v668, 1e-05
      %v670 = vrsqrt.pop %v669
      %v671 = vmul.f32 %v654, %v670
      %v672 = vmul.f32 %v655, %v670
      %v673 = vmul.f32 %v664, %v670
      %v674 = vsub.f32 %v671, %v673
      %v675 = vsub.f32 %v672, %v673
      %v676 = vmax.f32 %v674, 0.0
      %v677 = vmax.f32 %v675, 0.0
      %678 = vst [vmem:[%s251] sm:$0xff] %v676
      %679 = vst [vmem:[%s251 + $0x8] sm:$0xff] %v677
      %p680 = scmp.lt.s32.totalorder %s17, 1
      %s681 = scalar_select %p680, %s17, 1
      %s682 = smul.addr %s681, 2
      %s683 = smul.addr %s682, 8
      %s684 = scalar_lea.vmem %s6, %s683
      // Predicated region
      $region45: #{resblock_forward.1} parent=43 // pred_check
        %p685 = pneg %p166
      $region46: #{resblock_forward.1} parent=43 // pred_check_branch
        %687 = sbr.rel (%p685) target = $region48
      $region47: #{resblock_forward.1} parent=43 // pred_region
        _
      $region48: #{resblock_forward.1} parent=43 // pred_fallthru
        _
    $region44: #{resblock_forward.1} parent=5 // pred_fallthru
      _
    %p688 = scmp.le.s32.totalorder 2, %s12
    // Predicated region
    $region49: #{resblock_forward.1} parent=5 // pred_check
      %p689 = pneg %p688
    $region50: #{resblock_forward.1} parent=5 // pred_check_branch
      %691 = sbr.rel (%p689) target = $region52
    $region51: #{resblock_forward.1} parent=5 // pred_region
      %s692 = ssub.s32 %s12, 2
      // Predicated region
      $region53: #{resblock_forward.1} parent=51 // pred_check
        %p693 = pneg %p172
      $region54: #{resblock_forward.1} parent=51 // pred_check_branch
        %695 = sbr.rel (%p693) target = $region56
      $region55: #{resblock_forward.1} parent=51 // pred_region
        %p696 = scmp.lt.s32.totalorder %s18, 1
        %s697 = scalar_select %p696, %s18, 1
        %s698 = smul.addr %s697, 2
        %s699 = smul.addr %s698, 8
        %s700 = scalar_lea.vmem %s6, %s699
      $region56: #{resblock_forward.1} parent=51 // pred_fallthru
        _
    $region52: #{resblock_forward.1} parent=5 // pred_fallthru
      _
  $region6: #{resblock_forward.1} parent=0 // loop_footer
    %s16 = sadd.s32 1, %s12
  $region7: #{resblock_forward.1} parent=0 // loop_footer_branch
    %11 = sbr.rel target = $region3
  $region8: #{resblock_forward.1} parent=0 // loop_exit
    _

</llo_original>
